<compile_context>
chip_gen: v6e
topology: v6e:2x2x1
jax: 0.10.0
libtpu: 0.0.40
codegen_flags: <defaults>
</compile_context>

<pallas_src>
import functools

import jax
import jax.numpy as jnp
import numpy as np
from jax.experimental import pallas as pl
from jax.experimental.pallas import tpu as pltpu


def _round_up(v, m):
    return ((v + m - 1) // m) * m


@functools.lru_cache(maxsize=1)
def _vmem_capacity_bytes():
    """Per-core VMEM capacity; conservative fallback if the query is unavailable."""
    try:
        cap = int(getattr(pltpu.get_tpu_info(), "vmem_capacity_bytes", 0))
        if cap > 0:
            return cap
    except Exception:
        pass
    return 64 << 20  # v7x per-TC VMEM; safe lower bound for v5e/v6e as well


def _vmem_bytes(tb, in_f, out_f, train):
    # Streamed, double-buffered blocks: x, [eps], 3 (train) / 2 (eval) outputs.
    n_out = 3 if train else 2
    per_step = tb * in_f + n_out * tb * out_f + (tb * out_f if train else 0)
    # Resident fused weights/bias (constant index_map); assume 2 buffers.
    # TODO(synk): pipeline_mode=pl.Buffered(1) on the weight/bias specs would halve this.
    resident = in_f * 2 * out_f + 2 * out_f
    return 4 * (2 * per_step + 2 * resident)


def _pick_tb(batch, in_f, out_f, train, budget):
    b8 = _round_up(batch, 8)
    tb = min(1024, b8)                           # long DMA bursts on v5e/v6e
    if b8 >= 16:                                 # >= 2 grid steps: v7x megacore + overlap
        tb = min(tb, _round_up((b8 + 1) // 2, 8))
    if b8 >= 1024:                               # >= 4 steps for pipeline warm-up
        tb = min(tb, _round_up((b8 + 3) // 4, 8))
    while tb > 8 and _vmem_bytes(tb, in_f, out_f, train) > budget:
        tb -= 8
    return max(tb, 8)


def fuse_gaussian_sample_params(w_mu, b_mu, w_lv, b_lv):
    """Build the fused (In, 2*Out) weight and (1, 2*Out) bias slabs.

    Call ONCE per parameter update (not per forward): the concat is a full
    weight-sized HBM pass and must stay off the per-call path."""
    In, Out = w_mu.shape
    w = jnp.concatenate([w_mu.astype(jnp.float32), w_lv.astype(jnp.float32)], axis=1)
    b = jnp.concatenate([jnp.reshape(b_mu, (1, Out)).astype(jnp.float32),
                         jnp.reshape(b_lv, (1, Out)).astype(jnp.float32)], axis=1)
    return w, b


def _gs_train_kernel(x_ref, w_ref, b_ref, eps_ref, z_ref, mu_ref, lv_ref, *, out_f):
    # One fused MXU matmul for both heads: columns [0:out_f)=mu, [out_f:)=log_var.
    pre = jnp.dot(x_ref[...], w_ref[...], preferred_element_type=jnp.float32) + b_ref[...]
    mu = pre[:, :out_f]
    lv_pre = pre[:, out_f:]
    # Numerically stable softplus: max(x,0) + log1p(exp(-|x|)).
    log_var = jnp.maximum(lv_pre, 0.0) + jnp.log1p(jnp.exp(-jnp.abs(lv_pre)))
    z_ref[...] = jnp.exp(0.5 * log_var) * eps_ref[...] + mu
    mu_ref[...] = mu
    lv_ref[...] = log_var


def _gs_eval_kernel(x_ref, w_ref, b_ref, mu_ref, lv_ref, *, out_f):
    pre = jnp.dot(x_ref[...], w_ref[...], preferred_element_type=jnp.float32) + b_ref[...]
    lv_pre = pre[:, out_f:]
    mu_ref[...] = pre[:, :out_f]
    lv_ref[...] = jnp.maximum(lv_pre, 0.0) + jnp.log1p(jnp.exp(-jnp.abs(lv_pre)))


@functools.partial(jax.jit, static_argnames=("train",))
def gaussian_sample(x, w_fused, b_fused, epsilon=None, *, train=False):
    """x: (B, In) f32. w_fused/b_fused from fuse_gaussian_sample_params.
    epsilon: (B, Out) = beta * N(0,1) (train only). Returns (z, mu, log_var)."""
    B, In = x.shape
    Out = w_fused.shape[1] // 2
    if train and epsilon is None:
        raise ValueError("train=True requires an epsilon array of shape (B, Out).")
    # TODO(synk): optionally generate epsilon in-kernel (pltpu.prng_seed +
    # pltpu.stateful_normal, seed in SMEM) to drop one HBM stream; changes RNG
    # semantics vs host-side randn, so keep it behind a flag if added.

    vmem_cap = _vmem_capacity_bytes()
    budget = vmem_cap // 2                  # ~32 MiB on v7x, ~64 MiB on v5e/v6e
    TB = _pick_tb(B, In, Out, train, budget)
    grid_b = pl.cdiv(B, TB)                 # ragged last block: OOB rows masked on store

    in_specs = [
        pl.BlockSpec((TB, In), lambda i: (i, 0)),        # x: streamed per batch tile
        pl.BlockSpec((In, 2 * Out), lambda i: (0, 0)),   # fused weights: VMEM-resident
        pl.BlockSpec((1, 2 * Out), lambda i: (0, 0)),    # fused bias: VMEM-resident
    ]
    args = [x, w_fused, b_fused]

    if train:
        in_specs.append(pl.BlockSpec((TB, Out), lambda i: (i, 0)))   # epsilon: streamed
        args.append(epsilon)
        kernel = functools.partial(_gs_train_kernel, out_f=Out)
        n_out = 3
    else:
        kernel = functools.partial(_gs_eval_kernel, out_f=Out)
        n_out = 2

    out_spec = pl.BlockSpec((TB, Out), lambda i: (i, 0))
    out_shape = tuple(jax.ShapeDtypeStruct((B, Out), jnp.float32) for _ in range(n_out))

    est = _vmem_bytes(TB, In, Out, train)
    vmem_limit = min(max(int(1.5 * est) + (4 << 20), 32 << 20), int(0.75 * vmem_cap))
    # TODO(synk): for very large In*Out add a K ("arbitrary") grid axis with an f32
    # accumulator (or cast the fused weights to bf16) instead of shrinking TB on
    # v7x's 64 MiB VMEM.

    outs = pl.pallas_call(
        kernel,
        grid_spec=pl.GridSpec(
            grid=(grid_b,),
            in_specs=in_specs,
            out_specs=[out_spec] * n_out,
        ),
        out_shape=out_shape,
        compiler_params=pltpu.CompilerParams(
            dimension_semantics=("parallel",),
            vmem_limit_bytes=vmem_limit,
        ),
    )(*args)

    if train:
        z, mu, log_var = outs
    else:
        mu, log_var = outs
        z = mu   # eval: epsilon == 0 => z == mu (same array, no copy, no inf*0 NaN hazard)
    return z, mu, log_var


def _reference(x, w_mu, b_mu, w_lv, b_lv, epsilon, train):
    mu = x @ w_mu + b_mu
    log_var = jax.nn.softplus(x @ w_lv + b_lv)
    if train:
        z = jnp.exp(0.5 * log_var) * epsilon + mu
    else:
        z = mu
    return z, mu, log_var


if __name__ == "__main__":
    key = jax.random.PRNGKey(0)
    B, In, Out = 8, 32, 16
    beta = 1.0

    k_x, k_wm, k_bm, k_wl, k_bl, k_eps = jax.random.split(key, 6)

    # Deterministic nn.Linear-style init: U(-1/sqrt(In), 1/sqrt(In)).
    bound = 1.0 / np.sqrt(In)
    x = jax.random.normal(k_x, (B, In), jnp.float32)
    w_mu = jax.random.uniform(k_wm, (In, Out), jnp.float32, -bound, bound)
    b_mu = jax.random.uniform(k_bm, (1, Out), jnp.float32, -bound, bound)
    w_lv = jax.random.uniform(k_wl, (In, Out), jnp.float32, -bound, bound)
    b_lv = jax.random.uniform(k_bl, (1, Out), jnp.float32, -bound, bound)
    # epsilon = beta * randn  (as in reparametrize when train=True)
    epsilon = beta * jax.random.normal(k_eps, (B, Out), jnp.float32)

    # Param-update-time fusion: off the per-forward path.
    w_fused, b_fused = fuse_gaussian_sample_params(w_mu, b_mu, w_lv, b_lv)
    w_fused, b_fused = jax.block_until_ready((w_fused, b_fused))

    for train in (False, True):
        z, mu, log_var = gaussian_sample(
            x, w_fused, b_fused, epsilon if train else None, train=train)
        jax.block_until_ready((z, mu, log_var))
        z_r, mu_r, lv_r = _reference(x, w_mu, b_mu, w_lv, b_lv, epsilon, train)
        np.testing.assert_allclose(np.asarray(z), np.asarray(z_r), rtol=1e-5, atol=1e-5)
        np.testing.assert_allclose(np.asarray(mu), np.asarray(mu_r), rtol=1e-5, atol=1e-5)
        np.testing.assert_allclose(np.asarray(log_var), np.asarray(lv_r), rtol=1e-5, atol=1e-5)

    print("KERNEL_OK")
</pallas_src>

<mosaic_0001>
module attributes {stable_mosaic.version = 11 : i64} {
  func.func @_gs_eval_kernel(%arg0: i32, %arg1: memref<8x32xf32, #tpu.memory_space<vmem>>, %arg2: memref<32x32xf32, #tpu.memory_space<vmem>>, %arg3: memref<1x32xf32, #tpu.memory_space<vmem>>, %arg4: memref<8x16xf32, #tpu.memory_space<vmem>>, %arg5: memref<8x16xf32, #tpu.memory_space<vmem>>) attributes {dimension_semantics = [#tpu.dimension_semantics<parallel>], iteration_bounds = array<i64: 1>, scalar_prefetch = 0 : i64, scratch_operands = 0 : i64, tpu.core_type = #tpu.core_type<tc>, window_params = [{transform_indices = @transform_0, window_bounds = array<i64: 8, 32>}, {pipeline_mode = #tpu.pipeline_mode<synchronous>, transform_indices = @transform_1, window_bounds = array<i64: 32, 32>}, {pipeline_mode = #tpu.pipeline_mode<synchronous>, transform_indices = @transform_2, window_bounds = array<i64: 1, 32>}, {transform_indices = @transform_3, window_bounds = array<i64: 8, 16>}, {transform_indices = @transform_4, window_bounds = array<i64: 8, 16>}]} {
    %c0 = arith.constant 0 : index
    %c0_0 = arith.constant 0 : index
    %0 = vector.load %arg1[%c0, %c0_0] : memref<8x32xf32, #tpu.memory_space<vmem>>, vector<8x32xf32>
    %c0_1 = arith.constant 0 : index
    %c0_2 = arith.constant 0 : index
    %1 = vector.load %arg2[%c0_1, %c0_2] : memref<32x32xf32, #tpu.memory_space<vmem>>, vector<32x32xf32>
    %cst = arith.constant dense<0.000000e+00> : vector<8x32xf32>
    %2 = tpu.matmul %0, %1, %cst {dimension_numbers = #tpu.dot_dimension_numbers<[1], [0], [0], [1], [0, 0, 1, 1], [], []>} : vector<8x32xf32>, vector<32x32xf32>, vector<8x32xf32> -> vector<8x32xf32>
    %c0_3 = arith.constant 0 : index
    %c0_4 = arith.constant 0 : index
    %3 = vector.load %arg3[%c0_3, %c0_4] : memref<1x32xf32, #tpu.memory_space<vmem>>, vector<1x32xf32>
    %4 = vector.broadcast %3 : vector<1x32xf32> to vector<8x32xf32>
    %5 = arith.addf %2, %4 : vector<8x32xf32>
    %6 = vector.extract_strided_slice %5 {offsets = [0, 16], sizes = [8, 16], strides = [1, 1]} : vector<8x32xf32> to vector<8x16xf32>
    %7 = vector.extract_strided_slice %5 {offsets = [0, 0], sizes = [8, 16], strides = [1, 1]} : vector<8x32xf32> to vector<8x16xf32>
    %c0_5 = arith.constant 0 : index
    %c0_6 = arith.constant 0 : index
    %8 = vector.load %arg4[%c0_5, %c0_6] : memref<8x16xf32, #tpu.memory_space<vmem>>, vector<8x16xf32>
    tpu.vector_store %arg4[%c0_5, %c0_6], %7 {strides = array<i32>} : memref<8x16xf32, #tpu.memory_space<vmem>>, vector<8x16xf32>,
    %cst_7 = arith.constant 0.000000e+00 : f32
    %9 = vector.broadcast %cst_7 : f32 to vector<8x16xf32>
    %10 = arith.maximumf %6, %9 : vector<8x16xf32>
    %11 = math.absf %6 : vector<8x16xf32>
    %cst_8 = arith.constant 0.000000e+00 : f32
    %12 = vector.broadcast %cst_8 : f32 to vector<8x16xf32>
    %13 = arith.subf %12, %11 : vector<8x16xf32>
    %14 = math.exp %13 : vector<8x16xf32>
    %15 = math.log1p %14 : vector<8x16xf32>
    %16 = arith.addf %10, %15 : vector<8x16xf32>
    %c0_9 = arith.constant 0 : index
    %c0_10 = arith.constant 0 : index
    %17 = vector.load %arg5[%c0_9, %c0_10] : memref<8x16xf32, #tpu.memory_space<vmem>>, vector<8x16xf32>
    tpu.vector_store %arg5[%c0_9, %c0_10], %16 {strides = array<i32>} : memref<8x16xf32, #tpu.memory_space<vmem>>, vector<8x16xf32>,
    return
  }
  func.func @transform_0(%arg0: i32) -> (i32, i32) {
    %c0_i32 = arith.constant 0 : i32
    %c0_i32_0 = arith.constant 0 : i32
    return %arg0, %c0_i32 : i32, i32
  }
  func.func @transform_1(%arg0: i32) -> (i32, i32) {
    %c0_i32 = arith.constant 0 : i32
    %c0_i32_0 = arith.constant 0 : i32
    %c0_i32_1 = arith.constant 0 : i32
    return %c0_i32, %c0_i32_0 : i32, i32
  }
  func.func @transform_2(%arg0: i32) -> (i32, i32) {
    %c0_i32 = arith.constant 0 : i32
    %c0_i32_0 = arith.constant 0 : i32
    %c0_i32_1 = arith.constant 0 : i32
    return %c0_i32, %c0_i32_0 : i32, i32
  }
  func.func @transform_3(%arg0: i32) -> (i32, i32) {
    %c0_i32 = arith.constant 0 : i32
    %c0_i32_0 = arith.constant 0 : i32
    return %arg0, %c0_i32 : i32, i32
  }
  func.func @transform_4(%arg0: i32) -> (i32, i32) {
    %c0_i32 = arith.constant 0 : i32
    %c0_i32_0 = arith.constant 0 : i32
    return %arg0, %c0_i32 : i32, i32
  }
}

</mosaic_0001>

<llo_original>
// kernel: gaussian_sample.1
$region0: #{gaussian_sample.1}
  #allocation0 [shape = 'u32[]', space=smem, size = 0x4, offset = 0x4, fixed_abs, tag = 'smem constant byte address 0x4 - core index']
  #allocation1 [shape = 'u32[144,128]{1,0:T(1,128)}', space=vmem, size = 0x12000, scoped, tag = 'internal scratch']
  %s0 = inlined_call_operand.hbm [shape: f32[8,32], index: 0, kind: input, shape index: {}]
  %s1 = inlined_call_operand.hbm [shape: f32[32,32], index: 1, kind: input, shape index: {}]
  %s2 = inlined_call_operand.vmem [shape: f32[1,32], index: 2, kind: input, shape index: {}]
  %s3 = inlined_call_operand.vmem [shape: f32[8,16], index: 3, kind: output, shape index: {0}]
  %s4 = inlined_call_operand.hbm [shape: f32[8,16], index: 4, kind: output, shape index: {1}]
  %5 = xla_tuple %s3, %s4
  %s6 = sld [smem:[#allocation0]]
  $region38: #{gaussian_sample.1} parent=0
    _
  %s8 = ssub.s32 1, %s6
  %s9 = scalar_select 0, %s8, %s6
  $region1: #{gaussian_sample.1} parent=0
    #allocation2 [shape = 'u8[4096]{0}', space=vmem, size = 0x1000, scoped, tag = 'input window, operand 0, single buffered']
    #allocation3 [shape = 's32[1]{0}', space=sflag, size = 0x4, scoped, tag = 'scoped memory for gaussian_sample.1']
    #allocation4 [shape = 's32[1]{0}', space=sflag, size = 0x4, scoped, tag = 'scoped memory for gaussian_sample.1']
    #allocation5 [shape = 'u8[16384]{0}', space=vmem, size = 0x4000, scoped, tag = 'input window, operand 1, single buffered']
    #allocation6 [shape = 's32[1]{0}', space=sflag, size = 0x4, scoped, tag = 'scoped memory for gaussian_sample.1']
    #allocation7 [shape = 'u8[4096]{0}', space=vmem, size = 0x1000, scoped, tag = 'output window, operand 1, single buffered']
    %10 = vsyncpa [#allocation3], 0
    %11 = vsyncpa [#allocation6], 0
    %12 = vsyncpa [#allocation4], 0
    // Predicated region
    $region2: #{gaussian_sample.1} parent=1 // pred_check
      _
    $region3: #{gaussian_sample.1} parent=1 // pred_check_branch
      %14 = sbr.rel (0) target = $region5
    $region4: #{gaussian_sample.1} parent=1 // pred_region
      %s16 = ssub.s32 128, 128
      %17 = vsyncadd [#allocation3], %s16
      %s19 = sshll.u32 [#allocation2], 4
      %s20 = int_to_ptr.vmem [resolvable:$true] %s19
      %22 = dma.hbm_to_vmem [thread:$0]  %s0, 128, %s20, [#allocation3]
    $region5: #{gaussian_sample.1} parent=1 // pred_fallthru
      _
    // Predicated region
    $region6: #{gaussian_sample.1} parent=1 // pred_check
      _
    $region7: #{gaussian_sample.1} parent=1 // pred_check_branch
      %24 = sbr.rel (0) target = $region9
    $region8: #{gaussian_sample.1} parent=1 // pred_region
      %s26 = ssub.s32 512, 512
      %27 = vsyncadd [#allocation6], %s26
      %s28 = sshll.u32 [#allocation5], 4
      %s29 = int_to_ptr.vmem [resolvable:$true] %s28
      %34 = dma.hbm_to_vmem [thread:$0]  %s1, 512, %s29, [#allocation6], 128, 128, 8
    $region9: #{gaussian_sample.1} parent=1 // pred_fallthru
      _
    // Predicated region
    $region10: #{gaussian_sample.1} parent=1 // pred_check
      _
    $region11: #{gaussian_sample.1} parent=1 // pred_check_branch
      %36 = sbr.rel (0) target = $region13
    $region12: #{gaussian_sample.1} parent=1 // pred_region
      _
    $region13: #{gaussian_sample.1} parent=1 // pred_fallthru
      _
    // Predicated region
    $region14: #{gaussian_sample.1} parent=1 // pred_check
      _
    $region15: #{gaussian_sample.1} parent=1 // pred_check_branch
      %38 = sbr.rel (0) target = $region17
    $region16: #{gaussian_sample.1} parent=1 // pred_region
      %39 = dma.done [#allocation3], 128
    $region17: #{gaussian_sample.1} parent=1 // pred_fallthru
      _
    // Predicated region
    $region18: #{gaussian_sample.1} parent=1 // pred_check
      _
    $region19: #{gaussian_sample.1} parent=1 // pred_check_branch
      %41 = sbr.rel (0) target = $region21
    $region20: #{gaussian_sample.1} parent=1 // pred_region
      %42 = dma.done [#allocation6], 512
    $region21: #{gaussian_sample.1} parent=1 // pred_fallthru
      _
    %v43 = vld [vmem:[#allocation2] sm:$0xff]
    %v44 = vld [vmem:[#allocation5] sm:$0xff]
    %v45 = vld [vmem:[#allocation5 + $0x8] sm:$0xff]
    %v46 = vld [vmem:[#allocation5 + $0x10] sm:$0xff]
    %v47 = vld [vmem:[#allocation5 + $0x18] sm:$0xff]
    %v48 = vld [vmem:[%s2] sm:$0x1]
    %v50 = vlaneseq
    %v51 = vshrl.u32 %v50, 7
    %v52 = vsub.s32 0, %v51
    %v53 = vrot.slane %v48, %v52
    %vm55 = vcmask 261120
    %v57 = vsel %vm55, %v43, 0
    %59 = vmatprep.subr.mxu0 0.0
    %60 = vmatpush1.msra.mxu0 0.0
    %61 = vmatprep.subr.mxu0 0.0
    %62 = vmatpush1.msra.mxu0 0.0
    %63 = vmatprep.subr.mxu0 0.0
    %64 = vmatpush1.msra.mxu0 0.0
    %65 = vmatprep.subr.mxu0 0.0
    %66 = vmatpush1.msra.mxu0 0.0
    %67 = vmatprep.subr.mxu0 0.0
    %68 = vmatpush1.msra.mxu0 0.0
    %69 = vmatprep.subr.mxu0 0.0
    %70 = vmatpush1.msra.mxu0 0.0
    %71 = vmatprep.subr.mxu0 0.0
    %72 = vmatpush1.msra.mxu0 0.0
    %73 = vmatprep.subr.mxu0 0.0
    %74 = vmatpush1.msra.mxu0 0.0
    %75 = vmatprep.subr.mxu0 0.0
    %76 = vmatpush1.msra.mxu0 0.0
    %77 = vmatprep.subr.mxu0 0.0
    %78 = vmatpush1.msra.mxu0 0.0
    %79 = vmatprep.subr.mxu0 0.0
    %80 = vmatpush1.msra.mxu0 0.0
    %81 = vmatprep.subr.mxu0 0.0
    %82 = vmatpush1.msra.mxu0 0.0
    %83 = vmatprep.subr.mxu0 0.0
    %84 = vmatpush1.msra.mxu0 %v47
    %85 = vmatprep.subr.mxu0 0.0
    %86 = vmatpush1.msra.mxu0 %v46
    %87 = vmatprep.subr.mxu0 0.0
    %88 = vmatpush1.msra.mxu0 %v45
    %89 = vmatprep.subr.mxu0 0.0
    %90 = vmatpush1.msra.mxu0 %v44
    %91 = vmatprep.subr.mxu0 0.0
    %92 = vmatpush2.msra.mxu0 0.0
    %93 = vmatprep.subr.mxu0 0.0
    %94 = vmatpush2.msra.mxu0 0.0
    %95 = vmatprep.subr.mxu0 0.0
    %96 = vmatpush2.msra.mxu0 0.0
    %97 = vmatprep.subr.mxu0 0.0
    %98 = vmatpush2.msra.mxu0 0.0
    %99 = vmatprep.subr.mxu0 0.0
    %100 = vmatpush2.msra.mxu0 0.0
    %101 = vmatprep.subr.mxu0 0.0
    %102 = vmatpush2.msra.mxu0 0.0
    %103 = vmatprep.subr.mxu0 0.0
    %104 = vmatpush2.msra.mxu0 0.0
    %105 = vmatprep.subr.mxu0 0.0
    %106 = vmatpush2.msra.mxu0 0.0
    %107 = vmatprep.subr.mxu0 0.0
    %108 = vmatpush2.msra.mxu0 0.0
    %109 = vmatprep.subr.mxu0 0.0
    %110 = vmatpush2.msra.mxu0 0.0
    %111 = vmatprep.subr.mxu0 0.0
    %112 = vmatpush2.msra.mxu0 0.0
    %113 = vmatprep.subr.mxu0 0.0
    %114 = vmatpush2.msra.mxu0 0.0
    %115 = vmatprep.subr.mxu0 0.0
    %116 = vmatpush2.msra.mxu0 0.0
    %117 = vmatprep.subr.mxu0 0.0
    %118 = vmatpush2.msra.mxu0 0.0
    %119 = vmatprep.subr.mxu0 0.0
    %120 = vmatpush2.msra.mxu0 0.0
    %121 = vmatprep.subr.mxu0 0.0
    %122 = vmatpush2.msra.mxu0 0.0
    %123 = vmatprep.mubr.f32.mxu0 0.0
    %124 = vmatmul.mubr.f32.gmra.mxu0 %v57
    %v125 = vpop.f32.mrf.mxu0
    %v126 = vadd.f32 %v53, %v125
    %v127 = vpop.f32.mrf.mxu0
    %128 = vdwg.mxu0
    %vm129 = vcmask 130048
    %130 = vst.msk [vmem:[%s3] sm:$0xff] %vm129, %v126
    %v131 = vmax.f32 %v126, 0.0
    %v132 = vand.u32 2147483647, %v126
    %v133 = vsub.f32 0.0, %v132
    %v134 = vmul.f32 %v133, 1.442695
    %v135 = vpow.pop %v134
    %v136 = vadd.f32 %v135, 1.0
    %v137 = vlog2.pop %v136
    %v138 = vmul.f32 %v137, 0.6931472
    %v139 = vmul.f32 -0.5, %v135
    %v140 = vadd.f32 %v139, 1.0
    %v141 = vmul.f32 %v140, %v135
    %v142 = vand.u32 2147483647, %v135
    %vm143 = vcmp.lt.f32.partialorder %v142, 0.0004427343
    %v144 = vsel %vm143, %v141, %v138
    %v145 = vadd.f32 %v131, %v144
    %147 = vrot.lane.b32.xlu0 %v145, 112
    %v148 = vpop.permute.xlu0 %147
    %150 = vst.msk [vmem:[#allocation7] sm:$0xff] %vm129, %v148
    // Predicated region
    $region22: #{gaussian_sample.1} parent=1 // pred_check
      _
    $region23: #{gaussian_sample.1} parent=1 // pred_check_branch
      %152 = sbr.rel (0) target = $region25
    $region24: #{gaussian_sample.1} parent=1 // pred_region
      _
    $region25: #{gaussian_sample.1} parent=1 // pred_fallthru
      _
    // Predicated region
    $region26: #{gaussian_sample.1} parent=1 // pred_check
      _
    $region27: #{gaussian_sample.1} parent=1 // pred_check_branch
      %154 = sbr.rel (0) target = $region29
    $region28: #{gaussian_sample.1} parent=1 // pred_region
      %s156 = ssub.s32 128, 128
      %157 = vsyncadd [#allocation4], %s156
      %s159 = sshll.u32 [#allocation7], 4
      %s160 = int_to_ptr.vmem [resolvable:$true] %s159
      %162 = dma.vmem_to_hbm [thread:$0]  %s160, 128, %s4, [#allocation4]
    $region29: #{gaussian_sample.1} parent=1 // pred_fallthru
      _
    // Predicated region
    $region30: #{gaussian_sample.1} parent=1 // pred_check
      _
    $region31: #{gaussian_sample.1} parent=1 // pred_check_branch
      %164 = sbr.rel (0) target = $region33
    $region32: #{gaussian_sample.1} parent=1 // pred_region
      _
    $region33: #{gaussian_sample.1} parent=1 // pred_fallthru
      _
    // Predicated region
    $region34: #{gaussian_sample.1} parent=1 // pred_check
      _
    $region35: #{gaussian_sample.1} parent=1 // pred_check_branch
      %166 = sbr.rel (0) target = $region37
    $region36: #{gaussian_sample.1} parent=1 // pred_region
      %167 = dma.done [#allocation4], 128
    $region37: #{gaussian_sample.1} parent=1 // pred_fallthru
      _
    %168 = vsyncpa [#allocation3], 1
    %169 = vsyncpa [#allocation6], 1
    %170 = vsyncpa [#allocation4], 1

</llo_original>
